<compile_context>
chip_gen: v6e
topology: v6e:2x2x1
jax: 0.10.0
libtpu: 0.0.40
codegen_flags: <defaults>
</compile_context>

<pallas_src>
import functools

import jax
import jax.numpy as jnp
from jax import lax
from jax.experimental import pallas as pl
from jax.experimental.pallas import tpu as pltpu


# Contract dim 1 of both operands: X_i @ X_j.T without materializing a transpose.
_NT = (((1,), (1,)), ((), ()))


def _style_loss_kernel(xi_ref, xj_ref, yi_ref, yj_ref, o_ref, gx_acc, gy_acc,
                       *, inv_total):
    i = pl.program_id(0)
    j = pl.program_id(1)
    k = pl.program_id(2)

    @pl.when(k == 0)
    def _():
        gx_acc[...] = jnp.zeros_like(gx_acc)
        gy_acc[...] = jnp.zeros_like(gy_acc)

    # G = F @ F.T is symmetric: only accumulate upper-triangular (j >= i) tiles.
    # Skipped tiles keep zero accumulators and emit a zero partial below.
    @pl.when(j >= i)
    def _():
        gx_acc[...] += lax.dot_general(
            xi_ref[...], xj_ref[...], _NT, preferred_element_type=jnp.float32)
        gy_acc[...] += lax.dot_general(
            yi_ref[...], yj_ref[...], _NT, preferred_element_type=jnp.float32)

    @pl.when(k == pl.num_programs(2) - 1)
    def _():
        diff = gx_acc[...] - gy_acc[...]
        # Off-diagonal tiles appear twice in the full gram matrix -> weight 2.
        scale = jnp.where(j == i, inv_total, 2.0 * inv_total).astype(jnp.float32)
        partial = jnp.sum(diff * diff) * scale
        # Lane-dense (8, 128) output block: partial in [0, 0], zeros elsewhere.
        row = lax.broadcasted_iota(jnp.int32, o_ref.shape, 0)
        col = lax.broadcasted_iota(jnp.int32, o_ref.shape, 1)
        o_ref[...] = jnp.where((row == 0) & (col == 0), partial, 0.0).astype(
            jnp.float32)


def _round_up(v, m):
    return -(-v // m) * m


def style_loss(input_features, target_features):
    """MSE between normalized gram matrices of NCHW feature maps (StyleLoss)."""
    a, b, c, d = input_features.shape
    assert target_features.shape == input_features.shape

    M = a * b          # rows of the feature matrix
    K = c * d          # cols of the feature matrix
    x = input_features.reshape(M, K)
    y = target_features.reshape(M, K)

    # ---- tile selection (lane/sublane aligned, bounded VMEM footprint) ----
    # K tile: multiple of 128, capped so double-buffered input blocks stay small.
    tk_cap = 2048 if x.dtype == jnp.bfloat16 else 1024
    tk = min(_round_up(K, 128), tk_cap)
    K_pad = _round_up(K, tk)
    # M tile: multiple of 8, capped at 256 (fills the 256x256 MXU on v6e/v7x).
    tm = min(_round_up(M, 8), 256)
    M_pad = _round_up(M, tm)

    if (M_pad, K_pad) != (M, K):
        # Zero rows/columns add nothing to either gram matrix -> loss unchanged.
        x = jnp.pad(x, ((0, M_pad - M), (0, K_pad - K)))
        y = jnp.pad(y, ((0, M_pad - M), (0, K_pad - K)))

    gi = M_pad // tm
    gj = M_pad // tm
    gk = K_pad // tk

    # Folded normalization: mean(((Gx - Gy) / (a*b*c*d))^2) over (a*b)^2 entries.
    gram_norm = float(a * b * c * d)
    inv_total = 1.0 / (gram_norm * gram_norm * float(M) * float(M))

    kernel = functools.partial(_style_loss_kernel, inv_total=inv_total)

    partials = pl.pallas_call(
        kernel,
        out_shape=jax.ShapeDtypeStruct((gi * 8, gj * 128), jnp.float32),
        grid_spec=pltpu.PrefetchScalarGridSpec(
            num_scalar_prefetch=0,
            grid=(gi, gj, gk),
            in_specs=[
                pl.BlockSpec((tm, tk), lambda i, j, k: (i, k)),   # x rows i-tile
                pl.BlockSpec((tm, tk), lambda i, j, k: (j, k)),   # x rows j-tile
                pl.BlockSpec((tm, tk), lambda i, j, k: (i, k)),   # y rows i-tile
                pl.BlockSpec((tm, tk), lambda i, j, k: (j, k)),   # y rows j-tile
            ],
            out_specs=pl.BlockSpec((8, 128), lambda i, j, k: (i, j)),
            scratch_shapes=[
                pltpu.VMEM((tm, tm), jnp.float32),
                pltpu.VMEM((tm, tm), jnp.float32),
            ],
        ),
        compiler_params=pltpu.CompilerParams(
            dimension_semantics=("parallel", "parallel", "arbitrary"),
        ),
    )(x, x, y, y)

    # Each (i, j) tile wrote its weighted partial into element [0, 0] of its
    # (8, 128) output block and zeros elsewhere; summing recovers the loss.
    return jnp.sum(partials)


def _style_loss_ref(input_features, target_features):
    a, b, c, d = input_features.shape
    fx = input_features.reshape(a * b, c * d).astype(jnp.float32)
    fy = target_features.reshape(a * b, c * d).astype(jnp.float32)
    gx = (fx @ fx.T) / (a * b * c * d)
    gy = (fy @ fy.T) / (a * b * c * d)
    return jnp.mean((gx - gy) ** 2)


if __name__ == "__main__":
    key = jax.random.PRNGKey(0)
    k1, k2 = jax.random.split(key)
    # NCHW feature maps, as a VGG-style layer would produce.
    shape = (2, 4, 16, 16)
    input_features = jax.random.normal(k1, shape, dtype=jnp.float32)
    target_features = jax.random.normal(k2, shape, dtype=jnp.float32)

    loss = style_loss(input_features, target_features)
    loss = jax.block_until_ready(loss)

    ref = _style_loss_ref(input_features, target_features)
    assert jnp.allclose(loss, ref, rtol=1e-5, atol=1e-6), (loss, ref)

    print("KERNEL_OK")
</pallas_src>

<mosaic_0001>
module attributes {stable_mosaic.version = 11 : i64} {
  func.func @_style_loss_kernel(%arg0: i32, %arg1: i32, %arg2: i32, %arg3: memref<8x256xf32, #tpu.memory_space<vmem>>, %arg4: memref<8x256xf32, #tpu.memory_space<vmem>>, %arg5: memref<8x256xf32, #tpu.memory_space<vmem>>, %arg6: memref<8x256xf32, #tpu.memory_space<vmem>>, %arg7: memref<8x128xf32, #tpu.memory_space<vmem>>, %arg8: memref<8x8xf32, #tpu.memory_space<vmem>>, %arg9: memref<8x8xf32, #tpu.memory_space<vmem>>) attributes {dimension_semantics = [#tpu.dimension_semantics<parallel>, #tpu.dimension_semantics<parallel>, #tpu.dimension_semantics<arbitrary>], iteration_bounds = array<i64: 1, 1, 1>, scalar_prefetch = 0 : i64, scratch_operands = 2 : i64, tpu.core_type = #tpu.core_type<tc>, window_params = [{transform_indices = @transform_0, window_bounds = array<i64: 8, 256>}, {transform_indices = @transform_1, window_bounds = array<i64: 8, 256>}, {transform_indices = @transform_2, window_bounds = array<i64: 8, 256>}, {transform_indices = @transform_3, window_bounds = array<i64: 8, 256>}, {transform_indices = @transform_4, window_bounds = array<i64: 8, 128>}]} {
    %c0_i32 = arith.constant 0 : i32
    %0 = arith.cmpi eq, %arg2, %c0_i32 : i32
    %1 = arith.extui %0 : i1 to i32
    %c0_i32_0 = arith.constant 0 : i32
    %2 = arith.cmpi ne, %1, %c0_i32_0 : i32
    scf.if %2 {
      %cst = arith.constant 0.000000e+00 : f32
      %9 = vector.broadcast %cst : f32 to vector<8x8xf32>
      %c0 = arith.constant 0 : index
      %c0_4 = arith.constant 0 : index
      %10 = vector.load %arg8[%c0, %c0_4] : memref<8x8xf32, #tpu.memory_space<vmem>>, vector<8x8xf32>
      tpu.vector_store %arg8[%c0, %c0_4], %9 {strides = array<i32>} : memref<8x8xf32, #tpu.memory_space<vmem>>, vector<8x8xf32>,
      %cst_5 = arith.constant 0.000000e+00 : f32
      %11 = vector.broadcast %cst_5 : f32 to vector<8x8xf32>
      %c0_6 = arith.constant 0 : index
      %c0_7 = arith.constant 0 : index
      %12 = vector.load %arg9[%c0_6, %c0_7] : memref<8x8xf32, #tpu.memory_space<vmem>>, vector<8x8xf32>
      tpu.vector_store %arg9[%c0_6, %c0_7], %11 {strides = array<i32>} : memref<8x8xf32, #tpu.memory_space<vmem>>, vector<8x8xf32>,
    } else {
    }
    %3 = arith.cmpi sge, %arg1, %arg0 : i32
    %4 = arith.extui %3 : i1 to i32
    %c0_i32_1 = arith.constant 0 : i32
    %5 = arith.cmpi ne, %4, %c0_i32_1 : i32
    scf.if %5 {
      %c0 = arith.constant 0 : index
      %c0_4 = arith.constant 0 : index
      %9 = vector.load %arg8[%c0, %c0_4] : memref<8x8xf32, #tpu.memory_space<vmem>>, vector<8x8xf32>
      %c0_5 = arith.constant 0 : index
      %c0_6 = arith.constant 0 : index
      %10 = vector.load %arg3[%c0_5, %c0_6] : memref<8x256xf32, #tpu.memory_space<vmem>>, vector<8x256xf32>
      %c0_7 = arith.constant 0 : index
      %c0_8 = arith.constant 0 : index
      %11 = vector.load %arg4[%c0_7, %c0_8] : memref<8x256xf32, #tpu.memory_space<vmem>>, vector<8x256xf32>
      %cst = arith.constant dense<0.000000e+00> : vector<8x8xf32>
      %12 = tpu.matmul %10, %11, %cst {dimension_numbers = #tpu.dot_dimension_numbers<[1], [1], [0], [0], [0, 0, 1, 0], [], []>} : vector<8x256xf32>, vector<8x256xf32>, vector<8x8xf32> -> vector<8x8xf32>
      %13 = arith.addf %9, %12 : vector<8x8xf32>
      %c0_9 = arith.constant 0 : index
      %c0_10 = arith.constant 0 : index
      %14 = vector.load %arg8[%c0_9, %c0_10] : memref<8x8xf32, #tpu.memory_space<vmem>>, vector<8x8xf32>
      tpu.vector_store %arg8[%c0_9, %c0_10], %13 {strides = array<i32>} : memref<8x8xf32, #tpu.memory_space<vmem>>, vector<8x8xf32>,
      %c0_11 = arith.constant 0 : index
      %c0_12 = arith.constant 0 : index
      %15 = vector.load %arg9[%c0_11, %c0_12] : memref<8x8xf32, #tpu.memory_space<vmem>>, vector<8x8xf32>
      %c0_13 = arith.constant 0 : index
      %c0_14 = arith.constant 0 : index
      %16 = vector.load %arg5[%c0_13, %c0_14] : memref<8x256xf32, #tpu.memory_space<vmem>>, vector<8x256xf32>
      %c0_15 = arith.constant 0 : index
      %c0_16 = arith.constant 0 : index
      %17 = vector.load %arg6[%c0_15, %c0_16] : memref<8x256xf32, #tpu.memory_space<vmem>>, vector<8x256xf32>
      %cst_17 = arith.constant dense<0.000000e+00> : vector<8x8xf32>
      %18 = tpu.matmul %16, %17, %cst_17 {dimension_numbers = #tpu.dot_dimension_numbers<[1], [1], [0], [0], [0, 0, 1, 0], [], []>} : vector<8x256xf32>, vector<8x256xf32>, vector<8x8xf32> -> vector<8x8xf32>
      %19 = arith.addf %15, %18 : vector<8x8xf32>
      %c0_18 = arith.constant 0 : index
      %c0_19 = arith.constant 0 : index
      %20 = vector.load %arg9[%c0_18, %c0_19] : memref<8x8xf32, #tpu.memory_space<vmem>>, vector<8x8xf32>
      tpu.vector_store %arg9[%c0_18, %c0_19], %19 {strides = array<i32>} : memref<8x8xf32, #tpu.memory_space<vmem>>, vector<8x8xf32>,
    } else {
    }
    %c0_i32_2 = arith.constant 0 : i32
    %6 = arith.cmpi eq, %arg2, %c0_i32_2 : i32
    %7 = arith.extui %6 : i1 to i32
    %c0_i32_3 = arith.constant 0 : i32
    %8 = arith.cmpi ne, %7, %c0_i32_3 : i32
    scf.if %8 {
      %c0 = arith.constant 0 : index
      %c0_4 = arith.constant 0 : index
      %9 = vector.load %arg8[%c0, %c0_4] : memref<8x8xf32, #tpu.memory_space<vmem>>, vector<8x8xf32>
      %c0_5 = arith.constant 0 : index
      %c0_6 = arith.constant 0 : index
      %10 = vector.load %arg9[%c0_5, %c0_6] : memref<8x8xf32, #tpu.memory_space<vmem>>, vector<8x8xf32>
      %11 = arith.subf %9, %10 : vector<8x8xf32>
      %12 = arith.cmpi eq, %arg1, %arg0 : i32
      %cst = arith.constant 3.7252903E-9 : f32
      %cst_7 = arith.constant 7.4505806E-9 : f32
      %13 = arith.select %12, %cst, %cst_7 : f32
      %14 = arith.mulf %11, %11 : vector<8x8xf32>
      %15 = vector.shape_cast %14 : vector<8x8xf32> to vector<1x8x8xf32>
      %cst_8 = arith.constant dense<0.000000e+00> : vector<1xf32>
      %16 = vector.multi_reduction <add>, %15, %cst_8 [1, 2] : vector<1x8x8xf32> to vector<1xf32>
      %17 = vector.shape_cast %16 : vector<1xf32> to vector<1x1x1xf32>
      %18 = vector.extract %17[0, 0, 0] : f32 from vector<1x1x1xf32>
      %19 = arith.mulf %18, %13 : f32
      %20 = tpu.iota {dimensions = array<i32: 0>} : vector<8x128xi32>
      %21 = tpu.iota {dimensions = array<i32: 1>} : vector<8x128xi32>
      %c0_i32_9 = arith.constant 0 : i32
      %22 = vector.broadcast %c0_i32_9 : i32 to vector<8x128xi32>
      %23 = arith.cmpi eq, %20, %22 : vector<8x128xi32>
      %c0_i32_10 = arith.constant 0 : i32
      %24 = vector.broadcast %c0_i32_10 : i32 to vector<8x128xi32>
      %25 = arith.cmpi eq, %21, %24 : vector<8x128xi32>
      %26 = arith.andi %23, %25 : vector<8x128xi1>
      %cst_11 = arith.constant 0.000000e+00 : f32
      %27 = vector.broadcast %19 : f32 to vector<8x128xf32>
      %28 = vector.broadcast %cst_11 : f32 to vector<8x128xf32>
      %29 = arith.select %26, %27, %28 : vector<8x128xi1>, vector<8x128xf32>
      %c0_12 = arith.constant 0 : index
      %c0_13 = arith.constant 0 : index
      %30 = vector.load %arg7[%c0_12, %c0_13] : memref<8x128xf32, #tpu.memory_space<vmem>>, vector<8x128xf32>
      tpu.vector_store %arg7[%c0_12, %c0_13], %29 {strides = array<i32>} : memref<8x128xf32, #tpu.memory_space<vmem>>, vector<8x128xf32>,
    } else {
    }
    return
  }
  func.func @transform_0(%arg0: i32, %arg1: i32, %arg2: i32) -> (i32, i32) {
    %c0_i32 = arith.constant 0 : i32
    return %arg0, %arg2 : i32, i32
  }
  func.func @transform_1(%arg0: i32, %arg1: i32, %arg2: i32) -> (i32, i32) {
    %c0_i32 = arith.constant 0 : i32
    return %arg1, %arg2 : i32, i32
  }
  func.func @transform_2(%arg0: i32, %arg1: i32, %arg2: i32) -> (i32, i32) {
    %c0_i32 = arith.constant 0 : i32
    return %arg0, %arg2 : i32, i32
  }
  func.func @transform_3(%arg0: i32, %arg1: i32, %arg2: i32) -> (i32, i32) {
    %c0_i32 = arith.constant 0 : i32
    return %arg1, %arg2 : i32, i32
  }
  func.func @transform_4(%arg0: i32, %arg1: i32, %arg2: i32) -> (i32, i32) {
    %c0_i32 = arith.constant 0 : i32
    return %arg0, %arg1 : i32, i32
  }
}

</mosaic_0001>

<llo_original>
// kernel: tpu_custom_call.1
$region0: #{tpu_custom_call.1}
  #allocation0 [shape = 'u32[]', space=smem, size = 0x4, offset = 0x4, fixed_abs, tag = 'smem constant byte address 0x4 - core index']
  #allocation1 [shape = 'u32[144,128]{1,0:T(1,128)}', space=vmem, size = 0x12000, scoped, tag = 'internal scratch']
  #allocation2 [shape = 'f32[8,8]{1,0:T(8,128)}', space=vmem, size = 0x1000, scoped, tag = 'scratch operand']
  #allocation3 [shape = 'f32[8,8]{1,0:T(8,128)}', space=vmem, size = 0x1000, scoped, tag = 'scratch operand']
  %s0 = inlined_call_operand.hbm [shape: f32[8,256], index: 0, kind: input, shape index: {}]
  %s1 = inlined_call_operand.hbm [shape: f32[8,256], index: 1, kind: input, shape index: {}]
  %s2 = inlined_call_operand.hbm [shape: f32[8,256], index: 2, kind: input, shape index: {}]
  %s3 = inlined_call_operand.hbm [shape: f32[8,256], index: 3, kind: input, shape index: {}]
  %s4 = inlined_call_operand.hbm [shape: f32[8,128], index: 4, kind: output, shape index: {}]
  %s5 = sld [smem:[#allocation0]]
  $region54: #{tpu_custom_call.1} parent=0
    _
  %s7 = ssub.s32 1, %s5
  %s8 = scalar_select 0, %s7, %s5
  $region1: #{tpu_custom_call.1} parent=0
    #allocation4 [shape = 'u8[8192]{0}', space=vmem, size = 0x2000, scoped, tag = 'input window, operand 0, single buffered']
    #allocation5 [shape = 's32[1]{0}', space=sflag, size = 0x4, scoped, tag = 'scoped memory for tpu_custom_call.1']
    #allocation6 [shape = 's32[1]{0}', space=sflag, size = 0x4, scoped, tag = 'scoped memory for tpu_custom_call.1']
    #allocation7 [shape = 'u8[8192]{0}', space=vmem, size = 0x2000, scoped, tag = 'input window, operand 1, single buffered']
    #allocation8 [shape = 's32[1]{0}', space=sflag, size = 0x4, scoped, tag = 'scoped memory for tpu_custom_call.1']
    #allocation9 [shape = 'u8[8192]{0}', space=vmem, size = 0x2000, scoped, tag = 'input window, operand 2, single buffered']
    #allocation10 [shape = 'u8[8192]{0}', space=vmem, size = 0x2000, scoped, tag = 'input window, operand 3, single buffered']
    #allocation11 [shape = 's32[1]{0}', space=sflag, size = 0x4, scoped, tag = 'scoped memory for tpu_custom_call.1']
    #allocation12 [shape = 'u8[4096]{0}', space=vmem, size = 0x1000, scoped, tag = 'output window, operand 0, single buffered']
    %9 = vsyncpa [#allocation5], 0
    %10 = vsyncpa [#allocation8], 0
    %11 = vsyncpa [#allocation11], 0
    %12 = vsyncpa [#allocation6], 0
    // Predicated region
    $region2: #{tpu_custom_call.1} parent=1 // pred_check
      _
    $region3: #{tpu_custom_call.1} parent=1 // pred_check_branch
      %14 = sbr.rel (0) target = $region5
    $region4: #{tpu_custom_call.1} parent=1 // pred_region
      %s16 = ssub.s32 256, 256
      %17 = vsyncadd [#allocation5], %s16
      %s19 = sshll.u32 [#allocation4], 4
      %s20 = int_to_ptr.vmem [resolvable:$true] %s19
      %22 = dma.hbm_to_vmem [thread:$0]  %s0, 256, %s20, [#allocation5]
    $region5: #{tpu_custom_call.1} parent=1 // pred_fallthru
      _
    // Predicated region
    $region6: #{tpu_custom_call.1} parent=1 // pred_check
      _
    $region7: #{tpu_custom_call.1} parent=1 // pred_check_branch
      %24 = sbr.rel (0) target = $region9
    $region8: #{tpu_custom_call.1} parent=1 // pred_region
      %s26 = ssub.s32 256, 256
      %27 = vsyncadd [#allocation8], %s26
      %s29 = sshll.u32 [#allocation7], 4
      %s30 = int_to_ptr.vmem [resolvable:$true] %s29
      %32 = dma.hbm_to_vmem [thread:$0]  %s1, 256, %s30, [#allocation8]
    $region9: #{tpu_custom_call.1} parent=1 // pred_fallthru
      _
    // Predicated region
    $region10: #{tpu_custom_call.1} parent=1 // pred_check
      _
    $region11: #{tpu_custom_call.1} parent=1 // pred_check_branch
      %34 = sbr.rel (0) target = $region13
    $region12: #{tpu_custom_call.1} parent=1 // pred_region
      %s36 = ssub.s32 256, 256
      %37 = vsyncadd [#allocation8], %s36
      %s39 = sshll.u32 [#allocation9], 4
      %s40 = int_to_ptr.vmem [resolvable:$true] %s39
      %42 = dma.hbm_to_vmem [thread:$0]  %s2, 256, %s40, [#allocation8]
    $region13: #{tpu_custom_call.1} parent=1 // pred_fallthru
      _
    // Predicated region
    $region14: #{tpu_custom_call.1} parent=1 // pred_check
      _
    $region15: #{tpu_custom_call.1} parent=1 // pred_check_branch
      %44 = sbr.rel (0) target = $region17
    $region16: #{tpu_custom_call.1} parent=1 // pred_region
      %s46 = ssub.s32 256, 256
      %47 = vsyncadd [#allocation11], %s46
      %s49 = sshll.u32 [#allocation10], 4
      %s50 = int_to_ptr.vmem [resolvable:$true] %s49
      %52 = dma.hbm_to_vmem [thread:$0]  %s3, 256, %s50, [#allocation11]
    $region17: #{tpu_custom_call.1} parent=1 // pred_fallthru
      _
    // Predicated region
    $region18: #{tpu_custom_call.1} parent=1 // pred_check
      _
    $region19: #{tpu_custom_call.1} parent=1 // pred_check_branch
      %54 = sbr.rel (0) target = $region21
    $region20: #{tpu_custom_call.1} parent=1 // pred_region
      %55 = dma.done [#allocation5], 256
    $region21: #{tpu_custom_call.1} parent=1 // pred_fallthru
      _
    // Predicated region
    $region22: #{tpu_custom_call.1} parent=1 // pred_check
      _
    $region23: #{tpu_custom_call.1} parent=1 // pred_check_branch
      %57 = sbr.rel (0) target = $region25
    $region24: #{tpu_custom_call.1} parent=1 // pred_region
      %58 = dma.done [#allocation8], 256
    $region25: #{tpu_custom_call.1} parent=1 // pred_fallthru
      _
    // Predicated region
    $region26: #{tpu_custom_call.1} parent=1 // pred_check
      _
    $region27: #{tpu_custom_call.1} parent=1 // pred_check_branch
      %60 = sbr.rel (0) target = $region29
    $region28: #{tpu_custom_call.1} parent=1 // pred_region
      %61 = dma.done [#allocation8], 256
    $region29: #{tpu_custom_call.1} parent=1 // pred_fallthru
      _
    // Predicated region
    $region30: #{tpu_custom_call.1} parent=1 // pred_check
      _
    $region31: #{tpu_custom_call.1} parent=1 // pred_check_branch
      %63 = sbr.rel (0) target = $region33
    $region32: #{tpu_custom_call.1} parent=1 // pred_region
      %64 = dma.done [#allocation11], 256
    $region33: #{tpu_custom_call.1} parent=1 // pred_fallthru
      _
    %p65 = scmp.eq.s32.totalorder 0, 0
    // Predicated region
    $region34: #{tpu_custom_call.1} parent=1 // pred_check
      %p66 = pneg %p65
    $region35: #{tpu_custom_call.1} parent=1 // pred_check_branch
      %68 = sbr.rel (%p66) target = $region37
    $region36: #{tpu_custom_call.1} parent=1 // pred_region
      %vm69 = vcmask 64512
      %70 = vst.msk [vmem:[#allocation2] sm:$0xff] %vm69, 0.0
      %71 = vst.msk [vmem:[#allocation3] sm:$0xff] %vm69, 0.0
    $region37: #{tpu_custom_call.1} parent=1 // pred_fallthru
      _
    %p72 = scmp.ge.s32.totalorder 0, 0
    // Predicated region
    $region38: #{tpu_custom_call.1} parent=1 // pred_check
      %p73 = pneg %p72
    $region39: #{tpu_custom_call.1} parent=1 // pred_check_branch
      %75 = sbr.rel (%p73) target = $region41
    $region40: #{tpu_custom_call.1} parent=1 // pred_region
      %v76 = vld [vmem:[#allocation2] sm:$0xff]
      %v77 = vld [vmem:[#allocation4] sm:$0xff]
      %v78 = vld [vmem:[#allocation4 + $0x8] sm:$0xff]
      %v79 = vld [vmem:[#allocation7] sm:$0xff]
      %v80 = vld [vmem:[#allocation7 + $0x8] sm:$0xff]
      %81 = vmatprep.subr.mxu0 0.0
      %82 = vmatpush1.xpose.msra.mxu0 0.0
      %83 = vmatprep.subr.mxu0 0.0
      %84 = vmatpush1.xpose.msra.mxu0 0.0
      %85 = vmatprep.subr.mxu0 0.0
      %86 = vmatpush1.xpose.msra.mxu0 0.0
      %87 = vmatprep.subr.mxu0 0.0
      %88 = vmatpush1.xpose.msra.mxu0 0.0
      %89 = vmatprep.subr.mxu0 0.0
      %90 = vmatpush1.xpose.msra.mxu0 0.0
      %91 = vmatprep.subr.mxu0 0.0
      %92 = vmatpush1.xpose.msra.mxu0 0.0
      %93 = vmatprep.subr.mxu0 0.0
      %94 = vmatpush1.xpose.msra.mxu0 0.0
      %95 = vmatprep.subr.mxu0 0.0
      %96 = vmatpush1.xpose.msra.mxu0 0.0
      %97 = vmatprep.subr.mxu0 0.0
      %98 = vmatpush1.xpose.msra.mxu0 0.0
      %99 = vmatprep.subr.mxu0 0.0
      %100 = vmatpush1.xpose.msra.mxu0 0.0
      %101 = vmatprep.subr.mxu0 0.0
      %102 = vmatpush1.xpose.msra.mxu0 0.0
      %103 = vmatprep.subr.mxu0 0.0
      %104 = vmatpush1.xpose.msra.mxu0 0.0
      %105 = vmatprep.subr.mxu0 0.0
      %106 = vmatpush1.xpose.msra.mxu0 0.0
      %107 = vmatprep.subr.mxu0 0.0
      %108 = vmatpush1.xpose.msra.mxu0 0.0
      %109 = vmatprep.subr.mxu0 0.0
      %110 = vmatpush1.xpose.msra.mxu0 0.0
      %111 = vmatprep.subr.mxu0 %v80
      %112 = vmatpush1.xpose.msra.mxu0 %v79
      %113 = vmatprep.subr.mxu0 0.0
      %114 = vmatpush2.xpose.msra.mxu0 0.0
      %115 = vmatprep.subr.mxu0 0.0
      %116 = vmatpush2.xpose.msra.mxu0 0.0
      %117 = vmatprep.subr.mxu0 0.0
      %118 = vmatpush2.xpose.msra.mxu0 0.0
      %119 = vmatprep.subr.mxu0 0.0
      %120 = vmatpush2.xpose.msra.mxu0 0.0
      %121 = vmatprep.subr.mxu0 0.0
      %122 = vmatpush2.xpose.msra.mxu0 0.0
      %123 = vmatprep.subr.mxu0 0.0
      %124 = vmatpush2.xpose.msra.mxu0 0.0
      %125 = vmatprep.subr.mxu0 0.0
      %126 = vmatpush2.xpose.msra.mxu0 0.0
      %127 = vmatprep.subr.mxu0 0.0
      %128 = vmatpush2.xpose.msra.mxu0 0.0
      %129 = vmatprep.subr.mxu0 0.0
      %130 = vmatpush2.xpose.msra.mxu0 0.0
      %131 = vmatprep.subr.mxu0 0.0
      %132 = vmatpush2.xpose.msra.mxu0 0.0
      %133 = vmatprep.subr.mxu0 0.0
      %134 = vmatpush2.xpose.msra.mxu0 0.0
      %135 = vmatprep.subr.mxu0 0.0
      %136 = vmatpush2.xpose.msra.mxu0 0.0
      %137 = vmatprep.subr.mxu0 0.0
      %138 = vmatpush2.xpose.msra.mxu0 0.0
      %139 = vmatprep.subr.mxu0 0.0
      %140 = vmatpush2.xpose.msra.mxu0 0.0
      %141 = vmatprep.subr.mxu0 0.0
      %142 = vmatpush2.xpose.msra.mxu0 0.0
      %143 = vmatprep.subr.mxu0 0.0
      %144 = vmatpush2.xpose.msra.mxu0 0.0
      %145 = vmatprep.mubr.f32.mxu0 %v78
      %146 = vmatmul.mubr.f32.gmra.mxu0 %v77
      %v147 = vpop.f32.mrf.mxu0
      %v148 = vadd.f32 0.0, %v147
      %v149 = vpop.f32.mrf.mxu0
      %150 = vdwg.mxu0
      %v151 = vadd.f32 %v76, %v148
      %vm152 = vcmask 64512
      %153 = vst.msk [vmem:[#allocation2] sm:$0xff] %vm152, %v151
      %v154 = vld [vmem:[#allocation3] sm:$0xff]
      %v155 = vld [vmem:[#allocation9] sm:$0xff]
      %v156 = vld [vmem:[#allocation9 + $0x8] sm:$0xff]
      %v157 = vld [vmem:[#allocation10] sm:$0xff]
      %v158 = vld [vmem:[#allocation10 + $0x8] sm:$0xff]
      %159 = vmatprep.subr.mxu0 0.0
      %160 = vmatpush1.xpose.msra.mxu0 0.0
      %161 = vmatprep.subr.mxu0 0.0
      %162 = vmatpush1.xpose.msra.mxu0 0.0
      %163 = vmatprep.subr.mxu0 0.0
      %164 = vmatpush1.xpose.msra.mxu0 0.0
      %165 = vmatprep.subr.mxu0 0.0
      %166 = vmatpush1.xpose.msra.mxu0 0.0
      %167 = vmatprep.subr.mxu0 0.0
      %168 = vmatpush1.xpose.msra.mxu0 0.0
      %169 = vmatprep.subr.mxu0 0.0
      %170 = vmatpush1.xpose.msra.mxu0 0.0
      %171 = vmatprep.subr.mxu0 0.0
      %172 = vmatpush1.xpose.msra.mxu0 0.0
      %173 = vmatprep.subr.mxu0 0.0
      %174 = vmatpush1.xpose.msra.mxu0 0.0
      %175 = vmatprep.subr.mxu0 0.0
      %176 = vmatpush1.xpose.msra.mxu0 0.0
      %177 = vmatprep.subr.mxu0 0.0
      %178 = vmatpush1.xpose.msra.mxu0 0.0
      %179 = vmatprep.subr.mxu0 0.0
      %180 = vmatpush1.xpose.msra.mxu0 0.0
      %181 = vmatprep.subr.mxu0 0.0
      %182 = vmatpush1.xpose.msra.mxu0 0.0
      %183 = vmatprep.subr.mxu0 0.0
      %184 = vmatpush1.xpose.msra.mxu0 0.0
      %185 = vmatprep.subr.mxu0 0.0
      %186 = vmatpush1.xpose.msra.mxu0 0.0
      %187 = vmatprep.subr.mxu0 0.0
      %188 = vmatpush1.xpose.msra.mxu0 0.0
      %189 = vmatprep.subr.mxu0 %v158
      %190 = vmatpush1.xpose.msra.mxu0 %v157
      %191 = vmatprep.subr.mxu0 0.0
      %192 = vmatpush2.xpose.msra.mxu0 0.0
      %193 = vmatprep.subr.mxu0 0.0
      %194 = vmatpush2.xpose.msra.mxu0 0.0
      %195 = vmatprep.subr.mxu0 0.0
      %196 = vmatpush2.xpose.msra.mxu0 0.0
      %197 = vmatprep.subr.mxu0 0.0
      %198 = vmatpush2.xpose.msra.mxu0 0.0
      %199 = vmatprep.subr.mxu0 0.0
      %200 = vmatpush2.xpose.msra.mxu0 0.0
      %201 = vmatprep.subr.mxu0 0.0
      %202 = vmatpush2.xpose.msra.mxu0 0.0
      %203 = vmatprep.subr.mxu0 0.0
      %204 = vmatpush2.xpose.msra.mxu0 0.0
      %205 = vmatprep.subr.mxu0 0.0
      %206 = vmatpush2.xpose.msra.mxu0 0.0
      %207 = vmatprep.subr.mxu0 0.0
      %208 = vmatpush2.xpose.msra.mxu0 0.0
      %209 = vmatprep.subr.mxu0 0.0
      %210 = vmatpush2.xpose.msra.mxu0 0.0
      %211 = vmatprep.subr.mxu0 0.0
      %212 = vmatpush2.xpose.msra.mxu0 0.0
      %213 = vmatprep.subr.mxu0 0.0
      %214 = vmatpush2.xpose.msra.mxu0 0.0
      %215 = vmatprep.subr.mxu0 0.0
      %216 = vmatpush2.xpose.msra.mxu0 0.0
      %217 = vmatprep.subr.mxu0 0.0
      %218 = vmatpush2.xpose.msra.mxu0 0.0
      %219 = vmatprep.subr.mxu0 0.0
      %220 = vmatpush2.xpose.msra.mxu0 0.0
      %221 = vmatprep.subr.mxu0 0.0
      %222 = vmatpush2.xpose.msra.mxu0 0.0
      %223 = vmatprep.mubr.f32.mxu0 %v156
      %224 = vmatmul.mubr.f32.gmra.mxu0 %v155
      %v225 = vpop.f32.mrf.mxu0
      %v226 = vadd.f32 0.0, %v225
      %v227 = vpop.f32.mrf.mxu0
      %228 = vdwg.mxu0
      %v229 = vadd.f32 %v154, %v226
      %230 = vst.msk [vmem:[#allocation3] sm:$0xff] %vm152, %v229
    $region41: #{tpu_custom_call.1} parent=1 // pred_fallthru
      _
    // Predicated region
    $region42: #{tpu_custom_call.1} parent=1 // pred_check
      %p231 = pneg %p65
    $region43: #{tpu_custom_call.1} parent=1 // pred_check_branch
      %233 = sbr.rel (%p231) target = $region45
    $region44: #{tpu_custom_call.1} parent=1 // pred_region
      %v234 = vld [vmem:[#allocation2] sm:$0xff]
      %v235 = vld [vmem:[#allocation3] sm:$0xff]
      %v236 = vsub.f32 %v234, %v235
      %p237 = scmp.eq.s32.totalorder 0, 0
      %s238 = scalar_select %p237, 3.7252903e-09, 7.4505806e-09
      %v239 = vmul.f32 %v236, %v236
      %vm240 = vcmask 64512
      %v241 = vsel %vm240, %v239, 0.0
      %242 = vadd.xlane.f32.xlu0 %v241
      %v243 = vpop.xlane.xlu0 %242
      %v244 = vrot.slane %v243, 4
      %v245 = vadd.f32 %v243, %v244
      %v246 = vrot.slane %v245, 2
      %v247 = vadd.f32 %v245, %v246
      %v248 = vrot.slane %v247, 1
      %v249 = vadd.f32 %v247, %v248
      %s250 = vtos %v249
      %s251 = smul.f32 %s250, %s238
      %v252 = vlaneseq
      %v253 = vshrl.u32 %v252, 7
      %v254 = vlaneseq
      %v255 = vand.u32 %v254, 127
      %vm256 = vcmp.eq.s32.totalorder %v253, 0
      %vm257 = vcmp.eq.s32.totalorder %v255, 0
      %vm258 = vmand %vm256, %vm257
      %v259 = vstv %s251
      %v260 = vsel %vm258, %v259, 0.0
      %261 = vst [vmem:[#allocation12] sm:$0xff] %v260
    $region45: #{tpu_custom_call.1} parent=1 // pred_fallthru
      _
    // Predicated region
    $region46: #{tpu_custom_call.1} parent=1 // pred_check
      _
    $region47: #{tpu_custom_call.1} parent=1 // pred_check_branch
      %263 = sbr.rel (0) target = $region49
    $region48: #{tpu_custom_call.1} parent=1 // pred_region
      %s265 = ssub.s32 128, 128
      %266 = vsyncadd [#allocation6], %s265
      %s268 = sshll.u32 [#allocation12], 4
      %s269 = int_to_ptr.vmem [resolvable:$true] %s268
      %271 = dma.vmem_to_hbm [thread:$0]  %s269, 128, %s4, [#allocation6]
    $region49: #{tpu_custom_call.1} parent=1 // pred_fallthru
      _
    // Predicated region
    $region50: #{tpu_custom_call.1} parent=1 // pred_check
      _
    $region51: #{tpu_custom_call.1} parent=1 // pred_check_branch
      %273 = sbr.rel (0) target = $region53
    $region52: #{tpu_custom_call.1} parent=1 // pred_region
      %274 = dma.done [#allocation6], 128
    $region53: #{tpu_custom_call.1} parent=1 // pred_fallthru
      _
    %275 = vsyncpa [#allocation5], 1
    %276 = vsyncpa [#allocation8], 1
    %277 = vsyncpa [#allocation11], 1
    %278 = vsyncpa [#allocation6], 1

</llo_original>
